<compile_context>
chip_gen: v5e
topology: v5e:2x2
jax: 0.10.0
libtpu: 0.0.40
codegen_flags: <defaults>
</compile_context>

<pallas_src>
import functools

import jax
import jax.numpy as jnp
from jax.experimental import pallas as pl
from jax.experimental.pallas import tpu as pltpu


# ---------------------------------------------------------------------------
# Fused kernel: channel sum/max -> pad -> 3x3 conv -> sigmoid
# ---------------------------------------------------------------------------
def _spatial_attention_kernel(x_ref, w_ref, b_ref, o_ref, pad_ref,
                              *, C, H, W, NB):
    """One batch block (NB images) per grid step.

    x_ref:   [NB, C, H, W]   (VMEM)
    w_ref:   [18]            (SMEM)  flattened (cin, kh, kw) conv weights;
                                     the cin=0 ("avg") taps are pre-scaled by 1/C
    b_ref:   [1]             (SMEM)  conv bias
    o_ref:   [NB, 1, H, W]   (VMEM)
    pad_ref: [2, H+2, W+2]   (VMEM scratch) zero-padded {sum, max} maps
    """
    # Zero only the 1-element border strips (interior is fully overwritten per
    # image below; border is never touched by the interior stores).  Done
    # every step so it is correct regardless of per-core scratch instances.
    zrow = jnp.zeros((1, W + 2), jnp.float32)
    zcol = jnp.zeros((H + 2, 1), jnp.float32)
    for ch in range(2):
        pad_ref[ch, 0:1, :] = zrow
        pad_ref[ch, H + 1:H + 2, :] = zrow
        pad_ref[ch, :, 0:1] = zcol
        pad_ref[ch, :, W + 1:W + 2] = zcol

    bias = b_ref[0]

    for n in range(NB):
        # ---- single fused pass over channels: running sum + running max ----
        x0 = x_ref[n, 0].astype(jnp.float32)          # [H, W]
        s = x0
        m = x0
        for c in range(1, C):
            xc = x_ref[n, c].astype(jnp.float32)
            s = s + xc
            m = jnp.maximum(m, xc)
        # (1/C of the mean is already folded into the cin=0 conv weights.)

        # Interior of the zero-padded {sum, max} maps.
        pad_ref[0, 1:H + 1, 1:W + 1] = s
        pad_ref[1, 1:H + 1, 1:W + 1] = m

        # ---- 3x3 conv on the VPU ----
        # Combine the three kh rows at full padded width first (lane-aligned
        # loads), then take ONE lane slice per kw: 4 misaligned lane slices
        # total instead of 12.
        partial = []
        for ch in range(2):
            r0 = pad_ref[ch, 0:H, :]                  # [H, W+2]
            r1 = pad_ref[ch, 1:H + 1, :]
            r2 = pad_ref[ch, 2:H + 2, :]
            for kw in range(3):
                t = (w_ref[ch * 9 + 0 * 3 + kw] * r0 +
                     w_ref[ch * 9 + 1 * 3 + kw] * r1 +
                     w_ref[ch * 9 + 2 * 3 + kw] * r2)   # [H, W+2]
                partial.append(t[:, kw:kw + W])          # [H, W]

        # Balanced tree sum of the 6 partials (better VALU ILP than a chain).
        acc = ((partial[0] + partial[1]) + (partial[2] + partial[3])) \
            + (partial[4] + partial[5])

        o_ref[n, 0] = jax.nn.sigmoid(acc + bias).astype(o_ref.dtype)


# ---------------------------------------------------------------------------
# Wrapper
# ---------------------------------------------------------------------------
def spatial_attention(x, weight, bias):
    """x: [N, C, H, W] (NCHW); weight: [1, 2, 3, 3] (OIHW); bias: [1].
    Returns the sigmoid attention mask [N, 1, H, W] in x.dtype."""
    N, C, H, W = x.shape
    assert weight.shape == (1, 2, 3, 3) and bias.shape == (1,)

    # Fold the 1/C of the channel mean into the cin=0 ("avg") conv taps so the
    # kernel only accumulates a channel SUM.
    w = weight.astype(jnp.float32)
    w = w.at[:, 0].multiply(1.0 / C)
    w_flat = w.reshape(-1)                       # (cin, kh, kw) order, 18 taps
    b = bias.reshape(1).astype(jnp.float32)

    # Batch-block size: largest divisor of N whose input block stays <= ~4 MiB
    # (double-buffered ~8 MiB -> fits default scoped VMEM on v5e/v6e/v7x)
    # to amortize the per-grid-step overhead.
    per_image = C * H * W * x.dtype.itemsize
    budget = 4 * 1024 * 1024
    nb = 1
    for d in range(1, N + 1):
        if N % d == 0 and d * per_image <= budget:
            nb = d
    # For very large C*H*W a C-reduction grid axis (running sum/max scratch)
    # would be the next step; not needed at these shapes.

    kern = functools.partial(_spatial_attention_kernel, C=C, H=H, W=W, NB=nb)
    return pl.pallas_call(
        kern,
        out_shape=jax.ShapeDtypeStruct((N, 1, H, W), x.dtype),
        grid=(N // nb,),
        in_specs=[
            pl.BlockSpec((nb, C, H, W), lambda n: (n, 0, 0, 0)),
            pl.BlockSpec(memory_space=pltpu.MemorySpace.SMEM),   # weights
            pl.BlockSpec(memory_space=pltpu.MemorySpace.SMEM),   # bias
        ],
        out_specs=pl.BlockSpec((nb, 1, H, W), lambda n: (n, 0, 0, 0)),
        scratch_shapes=[pltpu.VMEM((2, H + 2, W + 2), jnp.float32)],
        compiler_params=pltpu.CompilerParams(
            dimension_semantics=("parallel",)),      # megacore split on v7x
    )(x, w_flat, b)


# ---------------------------------------------------------------------------
# Self-check
# ---------------------------------------------------------------------------
if __name__ == "__main__":
    key = jax.random.PRNGKey(0)
    kx, kw, kb = jax.random.split(key, 3)

    N, C, H, W = 2, 4, 16, 16
    x = jax.random.normal(kx, (N, C, H, W), jnp.float32)

    # PyTorch Conv2d(2, 1, 3) default init: U(-1/sqrt(fan_in), 1/sqrt(fan_in))
    fan_in = 2 * 3 * 3
    bound = 1.0 / (fan_in ** 0.5)
    weight = jax.random.uniform(kw, (1, 2, 3, 3), jnp.float32, -bound, bound)
    bias = jax.random.uniform(kb, (1,), jnp.float32, -bound, bound)

    out = jax.jit(spatial_attention)(x, weight, bias)
    out = jax.block_until_ready(out)

    # Plain-JAX reference (identical math to the PyTorch module).
    avg = jnp.mean(x, axis=1, keepdims=True)
    mx = jnp.max(x, axis=1, keepdims=True)
    cat = jnp.concatenate([avg, mx], axis=1)                  # [N, 2, H, W]
    ref = jax.lax.conv_general_dilated(
        cat, weight, window_strides=(1, 1), padding="SAME",
        dimension_numbers=("NCHW", "OIHW", "NCHW"))
    ref = jax.nn.sigmoid(ref + bias.reshape(1, 1, 1, 1))

    assert out.shape == (N, 1, H, W), out.shape
    assert bool(jnp.all(jnp.isfinite(out)))
    err = float(jnp.max(jnp.abs(out - ref)))
    assert err < 1e-5, err
    print("KERNEL_OK")
</pallas_src>

<mosaic_0001>
module attributes {stable_mosaic.version = 11 : i64} {
  func.func @_spatial_attention_kernel(%arg0: i32, %arg1: memref<2x4x16x16xf32, #tpu.memory_space<vmem>>, %arg2: memref<18xf32, #tpu.memory_space<smem>>, %arg3: memref<1xf32, #tpu.memory_space<smem>>, %arg4: memref<2x1x16x16xf32, #tpu.memory_space<vmem>>, %arg5: memref<2x18x18xf32, #tpu.memory_space<vmem>>) attributes {dimension_semantics = [#tpu.dimension_semantics<parallel>], iteration_bounds = array<i64: 1>, scalar_prefetch = 0 : i64, scratch_operands = 1 : i64, tpu.core_type = #tpu.core_type<tc>, window_params = [{transform_indices = @transform_0, window_bounds = array<i64: 2, 4, 16, 16>}, {transform_indices = @transform_1, window_bounds = array<i64: 18>}, {transform_indices = @transform_2, window_bounds = array<i64: 1>}, {transform_indices = @transform_3, window_bounds = array<i64: 2, 1, 16, 16>}]} {
    %cst = arith.constant 0.000000e+00 : f32
    %0 = vector.broadcast %cst : f32 to vector<1x18xf32>
    %cst_0 = arith.constant 0.000000e+00 : f32
    %1 = vector.broadcast %cst_0 : f32 to vector<18x1xf32>
    %c0 = arith.constant 0 : index
    %c0_1 = arith.constant 0 : index
    %c0_2 = arith.constant 0 : index
    %2 = vector.load %arg5[%c0, %c0_1, %c0_2] : memref<2x18x18xf32, #tpu.memory_space<vmem>>, vector<1x1x18xf32>
    %3 = vector.shape_cast %2 : vector<1x1x18xf32> to vector<1x18xf32>
    %4 = vector.shape_cast %0 : vector<1x18xf32> to vector<1x1x18xf32>
    tpu.vector_store %arg5[%c0, %c0_1, %c0_2], %4 {strides = array<i32>} : memref<2x18x18xf32, #tpu.memory_space<vmem>>, vector<1x1x18xf32>,
    %c0_3 = arith.constant 0 : index
    %c17 = arith.constant 17 : index
    %c0_4 = arith.constant 0 : index
    %5 = vector.load %arg5[%c0_3, %c17, %c0_4] : memref<2x18x18xf32, #tpu.memory_space<vmem>>, vector<1x1x18xf32>
    %6 = vector.shape_cast %5 : vector<1x1x18xf32> to vector<1x18xf32>
    %7 = vector.shape_cast %0 : vector<1x18xf32> to vector<1x1x18xf32>
    tpu.vector_store %arg5[%c0_3, %c17, %c0_4], %7 {strides = array<i32>} : memref<2x18x18xf32, #tpu.memory_space<vmem>>, vector<1x1x18xf32>,
    %c0_5 = arith.constant 0 : index
    %c0_6 = arith.constant 0 : index
    %c0_7 = arith.constant 0 : index
    %8 = vector.load %arg5[%c0_5, %c0_6, %c0_7] : memref<2x18x18xf32, #tpu.memory_space<vmem>>, vector<1x18x1xf32>
    %9 = vector.shape_cast %8 : vector<1x18x1xf32> to vector<18x1xf32>
    %10 = vector.shape_cast %1 : vector<18x1xf32> to vector<1x18x1xf32>
    tpu.vector_store %arg5[%c0_5, %c0_6, %c0_7], %10 {strides = array<i32>} : memref<2x18x18xf32, #tpu.memory_space<vmem>>, vector<1x18x1xf32>,
    %c0_8 = arith.constant 0 : index
    %c0_9 = arith.constant 0 : index
    %c17_10 = arith.constant 17 : index
    %11 = vector.load %arg5[%c0_8, %c0_9, %c17_10] : memref<2x18x18xf32, #tpu.memory_space<vmem>>, vector<1x18x1xf32>
    %12 = vector.shape_cast %11 : vector<1x18x1xf32> to vector<18x1xf32>
    %13 = vector.shape_cast %1 : vector<18x1xf32> to vector<1x18x1xf32>
    tpu.vector_store %arg5[%c0_8, %c0_9, %c17_10], %13 {strides = array<i32>} : memref<2x18x18xf32, #tpu.memory_space<vmem>>, vector<1x18x1xf32>,
    %c1 = arith.constant 1 : index
    %c0_11 = arith.constant 0 : index
    %c0_12 = arith.constant 0 : index
    %14 = vector.load %arg5[%c1, %c0_11, %c0_12] : memref<2x18x18xf32, #tpu.memory_space<vmem>>, vector<1x1x18xf32>
    %15 = vector.shape_cast %14 : vector<1x1x18xf32> to vector<1x18xf32>
    %16 = vector.shape_cast %0 : vector<1x18xf32> to vector<1x1x18xf32>
    tpu.vector_store %arg5[%c1, %c0_11, %c0_12], %16 {strides = array<i32>} : memref<2x18x18xf32, #tpu.memory_space<vmem>>, vector<1x1x18xf32>,
    %c1_13 = arith.constant 1 : index
    %c17_14 = arith.constant 17 : index
    %c0_15 = arith.constant 0 : index
    %17 = vector.load %arg5[%c1_13, %c17_14, %c0_15] : memref<2x18x18xf32, #tpu.memory_space<vmem>>, vector<1x1x18xf32>
    %18 = vector.shape_cast %17 : vector<1x1x18xf32> to vector<1x18xf32>
    %19 = vector.shape_cast %0 : vector<1x18xf32> to vector<1x1x18xf32>
    tpu.vector_store %arg5[%c1_13, %c17_14, %c0_15], %19 {strides = array<i32>} : memref<2x18x18xf32, #tpu.memory_space<vmem>>, vector<1x1x18xf32>,
    %c1_16 = arith.constant 1 : index
    %c0_17 = arith.constant 0 : index
    %c0_18 = arith.constant 0 : index
    %20 = vector.load %arg5[%c1_16, %c0_17, %c0_18] : memref<2x18x18xf32, #tpu.memory_space<vmem>>, vector<1x18x1xf32>
    %21 = vector.shape_cast %20 : vector<1x18x1xf32> to vector<18x1xf32>
    %22 = vector.shape_cast %1 : vector<18x1xf32> to vector<1x18x1xf32>
    tpu.vector_store %arg5[%c1_16, %c0_17, %c0_18], %22 {strides = array<i32>} : memref<2x18x18xf32, #tpu.memory_space<vmem>>, vector<1x18x1xf32>,
    %c1_19 = arith.constant 1 : index
    %c0_20 = arith.constant 0 : index
    %c17_21 = arith.constant 17 : index
    %23 = vector.load %arg5[%c1_19, %c0_20, %c17_21] : memref<2x18x18xf32, #tpu.memory_space<vmem>>, vector<1x18x1xf32>
    %24 = vector.shape_cast %23 : vector<1x18x1xf32> to vector<18x1xf32>
    %25 = vector.shape_cast %1 : vector<18x1xf32> to vector<1x18x1xf32>
    tpu.vector_store %arg5[%c1_19, %c0_20, %c17_21], %25 {strides = array<i32>} : memref<2x18x18xf32, #tpu.memory_space<vmem>>, vector<1x18x1xf32>,
    %c0_22 = arith.constant 0 : index
    %26 = memref.load %arg3[%c0_22] : memref<1xf32, #tpu.memory_space<smem>>
    %c0_23 = arith.constant 0 : index
    %c0_24 = arith.constant 0 : index
    %c0_25 = arith.constant 0 : index
    %c0_26 = arith.constant 0 : index
    %27 = vector.load %arg1[%c0_23, %c0_24, %c0_25, %c0_26] : memref<2x4x16x16xf32, #tpu.memory_space<vmem>>, vector<1x1x16x16xf32>
    %28 = vector.shape_cast %27 : vector<1x1x16x16xf32> to vector<16x16xf32>
    %c0_27 = arith.constant 0 : index
    %c1_28 = arith.constant 1 : index
    %c0_29 = arith.constant 0 : index
    %c0_30 = arith.constant 0 : index
    %29 = vector.load %arg1[%c0_27, %c1_28, %c0_29, %c0_30] : memref<2x4x16x16xf32, #tpu.memory_space<vmem>>, vector<1x1x16x16xf32>
    %30 = vector.shape_cast %29 : vector<1x1x16x16xf32> to vector<16x16xf32>
    %31 = arith.addf %28, %30 : vector<16x16xf32>
    %32 = arith.maximumf %28, %30 : vector<16x16xf32>
    %c0_31 = arith.constant 0 : index
    %c2 = arith.constant 2 : index
    %c0_32 = arith.constant 0 : index
    %c0_33 = arith.constant 0 : index
    %33 = vector.load %arg1[%c0_31, %c2, %c0_32, %c0_33] : memref<2x4x16x16xf32, #tpu.memory_space<vmem>>, vector<1x1x16x16xf32>
    %34 = vector.shape_cast %33 : vector<1x1x16x16xf32> to vector<16x16xf32>
    %35 = arith.addf %31, %34 : vector<16x16xf32>
    %36 = arith.maximumf %32, %34 : vector<16x16xf32>
    %c0_34 = arith.constant 0 : index
    %c3 = arith.constant 3 : index
    %c0_35 = arith.constant 0 : index
    %c0_36 = arith.constant 0 : index
    %37 = vector.load %arg1[%c0_34, %c3, %c0_35, %c0_36] : memref<2x4x16x16xf32, #tpu.memory_space<vmem>>, vector<1x1x16x16xf32>
    %38 = vector.shape_cast %37 : vector<1x1x16x16xf32> to vector<16x16xf32>
    %39 = arith.addf %35, %38 : vector<16x16xf32>
    %40 = arith.maximumf %36, %38 : vector<16x16xf32>
    %c0_37 = arith.constant 0 : index
    %c1_38 = arith.constant 1 : index
    %c1_39 = arith.constant 1 : index
    %41 = vector.load %arg5[%c0_37, %c1_38, %c1_39] : memref<2x18x18xf32, #tpu.memory_space<vmem>>, vector<1x16x16xf32>
    %42 = vector.shape_cast %41 : vector<1x16x16xf32> to vector<16x16xf32>
    %43 = vector.shape_cast %39 : vector<16x16xf32> to vector<1x16x16xf32>
    tpu.vector_store %arg5[%c0_37, %c1_38, %c1_39], %43 {strides = array<i32>} : memref<2x18x18xf32, #tpu.memory_space<vmem>>, vector<1x16x16xf32>,
    %c1_40 = arith.constant 1 : index
    %c1_41 = arith.constant 1 : index
    %c1_42 = arith.constant 1 : index
    %44 = vector.load %arg5[%c1_40, %c1_41, %c1_42] : memref<2x18x18xf32, #tpu.memory_space<vmem>>, vector<1x16x16xf32>
    %45 = vector.shape_cast %44 : vector<1x16x16xf32> to vector<16x16xf32>
    %46 = vector.shape_cast %40 : vector<16x16xf32> to vector<1x16x16xf32>
    tpu.vector_store %arg5[%c1_40, %c1_41, %c1_42], %46 {strides = array<i32>} : memref<2x18x18xf32, #tpu.memory_space<vmem>>, vector<1x16x16xf32>,
    %c0_43 = arith.constant 0 : index
    %c0_44 = arith.constant 0 : index
    %c0_45 = arith.constant 0 : index
    %47 = vector.load %arg5[%c0_43, %c0_44, %c0_45] : memref<2x18x18xf32, #tpu.memory_space<vmem>>, vector<1x16x18xf32>
    %48 = vector.shape_cast %47 : vector<1x16x18xf32> to vector<16x18xf32>
    %c0_46 = arith.constant 0 : index
    %c1_47 = arith.constant 1 : index
    %c0_48 = arith.constant 0 : index
    %49 = vector.load %arg5[%c0_46, %c1_47, %c0_48] : memref<2x18x18xf32, #tpu.memory_space<vmem>>, vector<1x16x18xf32>
    %50 = vector.shape_cast %49 : vector<1x16x18xf32> to vector<16x18xf32>
    %c0_49 = arith.constant 0 : index
    %c2_50 = arith.constant 2 : index
    %c0_51 = arith.constant 0 : index
    %51 = vector.load %arg5[%c0_49, %c2_50, %c0_51] : memref<2x18x18xf32, #tpu.memory_space<vmem>>, vector<1x16x18xf32>
    %52 = vector.shape_cast %51 : vector<1x16x18xf32> to vector<16x18xf32>
    %c0_52 = arith.constant 0 : index
    %53 = memref.load %arg2[%c0_52] : memref<18xf32, #tpu.memory_space<smem>>
    %54 = vector.broadcast %53 : f32 to vector<16x18xf32>
    %55 = arith.mulf %54, %48 : vector<16x18xf32>
    %c3_53 = arith.constant 3 : index
    %56 = memref.load %arg2[%c3_53] : memref<18xf32, #tpu.memory_space<smem>>
    %57 = vector.broadcast %56 : f32 to vector<16x18xf32>
    %58 = arith.mulf %57, %50 : vector<16x18xf32>
    %59 = arith.addf %55, %58 : vector<16x18xf32>
    %c6 = arith.constant 6 : index
    %60 = memref.load %arg2[%c6] : memref<18xf32, #tpu.memory_space<smem>>
    %61 = vector.broadcast %60 : f32 to vector<16x18xf32>
    %62 = arith.mulf %61, %52 : vector<16x18xf32>
    %63 = arith.addf %59, %62 : vector<16x18xf32>
    %64 = vector.extract_strided_slice %63 {offsets = [0, 0], sizes = [16, 16], strides = [1, 1]} : vector<16x18xf32> to vector<16x16xf32>
    %c1_54 = arith.constant 1 : index
    %65 = memref.load %arg2[%c1_54] : memref<18xf32, #tpu.memory_space<smem>>
    %66 = vector.broadcast %65 : f32 to vector<16x18xf32>
    %67 = arith.mulf %66, %48 : vector<16x18xf32>
    %c4 = arith.constant 4 : index
    %68 = memref.load %arg2[%c4] : memref<18xf32, #tpu.memory_space<smem>>
    %69 = vector.broadcast %68 : f32 to vector<16x18xf32>
    %70 = arith.mulf %69, %50 : vector<16x18xf32>
    %71 = arith.addf %67, %70 : vector<16x18xf32>
    %c7 = arith.constant 7 : index
    %72 = memref.load %arg2[%c7] : memref<18xf32, #tpu.memory_space<smem>>
    %73 = vector.broadcast %72 : f32 to vector<16x18xf32>
    %74 = arith.mulf %73, %52 : vector<16x18xf32>
    %75 = arith.addf %71, %74 : vector<16x18xf32>
    %76 = vector.extract_strided_slice %75 {offsets = [0, 1], sizes = [16, 16], strides = [1, 1]} : vector<16x18xf32> to vector<16x16xf32>
    %c2_55 = arith.constant 2 : index
    %77 = memref.load %arg2[%c2_55] : memref<18xf32, #tpu.memory_space<smem>>
    %78 = vector.broadcast %77 : f32 to vector<16x18xf32>
    %79 = arith.mulf %78, %48 : vector<16x18xf32>
    %c5 = arith.constant 5 : index
    %80 = memref.load %arg2[%c5] : memref<18xf32, #tpu.memory_space<smem>>
    %81 = vector.broadcast %80 : f32 to vector<16x18xf32>
    %82 = arith.mulf %81, %50 : vector<16x18xf32>
    %83 = arith.addf %79, %82 : vector<16x18xf32>
    %c8 = arith.constant 8 : index
    %84 = memref.load %arg2[%c8] : memref<18xf32, #tpu.memory_space<smem>>
    %85 = vector.broadcast %84 : f32 to vector<16x18xf32>
    %86 = arith.mulf %85, %52 : vector<16x18xf32>
    %87 = arith.addf %83, %86 : vector<16x18xf32>
    %88 = vector.extract_strided_slice %87 {offsets = [0, 2], sizes = [16, 16], strides = [1, 1]} : vector<16x18xf32> to vector<16x16xf32>
    %c1_56 = arith.constant 1 : index
    %c0_57 = arith.constant 0 : index
    %c0_58 = arith.constant 0 : index
    %89 = vector.load %arg5[%c1_56, %c0_57, %c0_58] : memref<2x18x18xf32, #tpu.memory_space<vmem>>, vector<1x16x18xf32>
    %90 = vector.shape_cast %89 : vector<1x16x18xf32> to vector<16x18xf32>
    %c1_59 = arith.constant 1 : index
    %c1_60 = arith.constant 1 : index
    %c0_61 = arith.constant 0 : index
    %91 = vector.load %arg5[%c1_59, %c1_60, %c0_61] : memref<2x18x18xf32, #tpu.memory_space<vmem>>, vector<1x16x18xf32>
    %92 = vector.shape_cast %91 : vector<1x16x18xf32> to vector<16x18xf32>
    %c1_62 = arith.constant 1 : index
    %c2_63 = arith.constant 2 : index
    %c0_64 = arith.constant 0 : index
    %93 = vector.load %arg5[%c1_62, %c2_63, %c0_64] : memref<2x18x18xf32, #tpu.memory_space<vmem>>, vector<1x16x18xf32>
    %94 = vector.shape_cast %93 : vector<1x16x18xf32> to vector<16x18xf32>
    %c9 = arith.constant 9 : index
    %95 = memref.load %arg2[%c9] : memref<18xf32, #tpu.memory_space<smem>>
    %96 = vector.broadcast %95 : f32 to vector<16x18xf32>
    %97 = arith.mulf %96, %90 : vector<16x18xf32>
    %c12 = arith.constant 12 : index
    %98 = memref.load %arg2[%c12] : memref<18xf32, #tpu.memory_space<smem>>
    %99 = vector.broadcast %98 : f32 to vector<16x18xf32>
    %100 = arith.mulf %99, %92 : vector<16x18xf32>
    %101 = arith.addf %97, %100 : vector<16x18xf32>
    %c15 = arith.constant 15 : index
    %102 = memref.load %arg2[%c15] : memref<18xf32, #tpu.memory_space<smem>>
    %103 = vector.broadcast %102 : f32 to vector<16x18xf32>
    %104 = arith.mulf %103, %94 : vector<16x18xf32>
    %105 = arith.addf %101, %104 : vector<16x18xf32>
    %106 = vector.extract_strided_slice %105 {offsets = [0, 0], sizes = [16, 16], strides = [1, 1]} : vector<16x18xf32> to vector<16x16xf32>
    %c10 = arith.constant 10 : index
    %107 = memref.load %arg2[%c10] : memref<18xf32, #tpu.memory_space<smem>>
    %108 = vector.broadcast %107 : f32 to vector<16x18xf32>
    %109 = arith.mulf %108, %90 : vector<16x18xf32>
    %c13 = arith.constant 13 : index
    %110 = memref.load %arg2[%c13] : memref<18xf32, #tpu.memory_space<smem>>
    %111 = vector.broadcast %110 : f32 to vector<16x18xf32>
    %112 = arith.mulf %111, %92 : vector<16x18xf32>
    %113 = arith.addf %109, %112 : vector<16x18xf32>
    %c16 = arith.constant 16 : index
    %114 = memref.load %arg2[%c16] : memref<18xf32, #tpu.memory_space<smem>>
    %115 = vector.broadcast %114 : f32 to vector<16x18xf32>
    %116 = arith.mulf %115, %94 : vector<16x18xf32>
    %117 = arith.addf %113, %116 : vector<16x18xf32>
    %118 = vector.extract_strided_slice %117 {offsets = [0, 1], sizes = [16, 16], strides = [1, 1]} : vector<16x18xf32> to vector<16x16xf32>
    %c11 = arith.constant 11 : index
    %119 = memref.load %arg2[%c11] : memref<18xf32, #tpu.memory_space<smem>>
    %120 = vector.broadcast %119 : f32 to vector<16x18xf32>
    %121 = arith.mulf %120, %90 : vector<16x18xf32>
    %c14 = arith.constant 14 : index
    %122 = memref.load %arg2[%c14] : memref<18xf32, #tpu.memory_space<smem>>
    %123 = vector.broadcast %122 : f32 to vector<16x18xf32>
    %124 = arith.mulf %123, %92 : vector<16x18xf32>
    %125 = arith.addf %121, %124 : vector<16x18xf32>
    %c17_65 = arith.constant 17 : index
    %126 = memref.load %arg2[%c17_65] : memref<18xf32, #tpu.memory_space<smem>>
    %127 = vector.broadcast %126 : f32 to vector<16x18xf32>
    %128 = arith.mulf %127, %94 : vector<16x18xf32>
    %129 = arith.addf %125, %128 : vector<16x18xf32>
    %130 = vector.extract_strided_slice %129 {offsets = [0, 2], sizes = [16, 16], strides = [1, 1]} : vector<16x18xf32> to vector<16x16xf32>
    %131 = arith.addf %64, %76 : vector<16x16xf32>
    %132 = arith.addf %88, %106 : vector<16x16xf32>
    %133 = arith.addf %131, %132 : vector<16x16xf32>
    %134 = arith.addf %118, %130 : vector<16x16xf32>
    %135 = arith.addf %133, %134 : vector<16x16xf32>
    %136 = vector.broadcast %26 : f32 to vector<16x16xf32>
    %137 = arith.addf %135, %136 : vector<16x16xf32>
    %138 = arith.negf %137 : vector<16x16xf32>
    %139 = math.exp %138 : vector<16x16xf32>
    %cst_66 = arith.constant 1.000000e+00 : f32
    %140 = vector.broadcast %cst_66 : f32 to vector<16x16xf32>
    %141 = arith.addf %140, %139 : vector<16x16xf32>
    %142 = arith.divf %140, %141 : vector<16x16xf32>
    %c0_67 = arith.constant 0 : index
    %c0_68 = arith.constant 0 : index
    %c0_69 = arith.constant 0 : index
    %c0_70 = arith.constant 0 : index
    %143 = vector.load %arg4[%c0_67, %c0_68, %c0_69, %c0_70] : memref<2x1x16x16xf32, #tpu.memory_space<vmem>>, vector<1x1x16x16xf32>
    %144 = vector.shape_cast %143 : vector<1x1x16x16xf32> to vector<16x16xf32>
    %145 = vector.shape_cast %142 : vector<16x16xf32> to vector<1x1x16x16xf32>
    tpu.vector_store %arg4[%c0_67, %c0_68, %c0_69, %c0_70], %145 {strides = array<i32>} : memref<2x1x16x16xf32, #tpu.memory_space<vmem>>, vector<1x1x16x16xf32>,
    %c1_71 = arith.constant 1 : index
    %c0_72 = arith.constant 0 : index
    %c0_73 = arith.constant 0 : index
    %c0_74 = arith.constant 0 : index
    %146 = vector.load %arg1[%c1_71, %c0_72, %c0_73, %c0_74] : memref<2x4x16x16xf32, #tpu.memory_space<vmem>>, vector<1x1x16x16xf32>
    %147 = vector.shape_cast %146 : vector<1x1x16x16xf32> to vector<16x16xf32>
    %c1_75 = arith.constant 1 : index
    %c1_76 = arith.constant 1 : index
    %c0_77 = arith.constant 0 : index
    %c0_78 = arith.constant 0 : index
    %148 = vector.load %arg1[%c1_75, %c1_76, %c0_77, %c0_78] : memref<2x4x16x16xf32, #tpu.memory_space<vmem>>, vector<1x1x16x16xf32>
    %149 = vector.shape_cast %148 : vector<1x1x16x16xf32> to vector<16x16xf32>
    %150 = arith.addf %147, %149 : vector<16x16xf32>
    %151 = arith.maximumf %147, %149 : vector<16x16xf32>
    %c1_79 = arith.constant 1 : index
    %c2_80 = arith.constant 2 : index
    %c0_81 = arith.constant 0 : index
    %c0_82 = arith.constant 0 : index
    %152 = vector.load %arg1[%c1_79, %c2_80, %c0_81, %c0_82] : memref<2x4x16x16xf32, #tpu.memory_space<vmem>>, vector<1x1x16x16xf32>
    %153 = vector.shape_cast %152 : vector<1x1x16x16xf32> to vector<16x16xf32>
    %154 = arith.addf %150, %153 : vector<16x16xf32>
    %155 = arith.maximumf %151, %153 : vector<16x16xf32>
    %c1_83 = arith.constant 1 : index
    %c3_84 = arith.constant 3 : index
    %c0_85 = arith.constant 0 : index
    %c0_86 = arith.constant 0 : index
    %156 = vector.load %arg1[%c1_83, %c3_84, %c0_85, %c0_86] : memref<2x4x16x16xf32, #tpu.memory_space<vmem>>, vector<1x1x16x16xf32>
    %157 = vector.shape_cast %156 : vector<1x1x16x16xf32> to vector<16x16xf32>
    %158 = arith.addf %154, %157 : vector<16x16xf32>
    %159 = arith.maximumf %155, %157 : vector<16x16xf32>
    %c0_87 = arith.constant 0 : index
    %c1_88 = arith.constant 1 : index
    %c1_89 = arith.constant 1 : index
    %160 = vector.load %arg5[%c0_87, %c1_88, %c1_89] : memref<2x18x18xf32, #tpu.memory_space<vmem>>, vector<1x16x16xf32>
    %161 = vector.shape_cast %160 : vector<1x16x16xf32> to vector<16x16xf32>
    %162 = vector.shape_cast %158 : vector<16x16xf32> to vector<1x16x16xf32>
    tpu.vector_store %arg5[%c0_87, %c1_88, %c1_89], %162 {strides = array<i32>} : memref<2x18x18xf32, #tpu.memory_space<vmem>>, vector<1x16x16xf32>,
    %c1_90 = arith.constant 1 : index
    %c1_91 = arith.constant 1 : index
    %c1_92 = arith.constant 1 : index
    %163 = vector.load %arg5[%c1_90, %c1_91, %c1_92] : memref<2x18x18xf32, #tpu.memory_space<vmem>>, vector<1x16x16xf32>
    %164 = vector.shape_cast %163 : vector<1x16x16xf32> to vector<16x16xf32>
    %165 = vector.shape_cast %159 : vector<16x16xf32> to vector<1x16x16xf32>
    tpu.vector_store %arg5[%c1_90, %c1_91, %c1_92], %165 {strides = array<i32>} : memref<2x18x18xf32, #tpu.memory_space<vmem>>, vector<1x16x16xf32>,
    %c0_93 = arith.constant 0 : index
    %c0_94 = arith.constant 0 : index
    %c0_95 = arith.constant 0 : index
    %166 = vector.load %arg5[%c0_93, %c0_94, %c0_95] : memref<2x18x18xf32, #tpu.memory_space<vmem>>, vector<1x16x18xf32>
    %167 = vector.shape_cast %166 : vector<1x16x18xf32> to vector<16x18xf32>
    %c0_96 = arith.constant 0 : index
    %c1_97 = arith.constant 1 : index
    %c0_98 = arith.constant 0 : index
    %168 = vector.load %arg5[%c0_96, %c1_97, %c0_98] : memref<2x18x18xf32, #tpu.memory_space<vmem>>, vector<1x16x18xf32>
    %169 = vector.shape_cast %168 : vector<1x16x18xf32> to vector<16x18xf32>
    %c0_99 = arith.constant 0 : index
    %c2_100 = arith.constant 2 : index
    %c0_101 = arith.constant 0 : index
    %170 = vector.load %arg5[%c0_99, %c2_100, %c0_101] : memref<2x18x18xf32, #tpu.memory_space<vmem>>, vector<1x16x18xf32>
    %171 = vector.shape_cast %170 : vector<1x16x18xf32> to vector<16x18xf32>
    %c0_102 = arith.constant 0 : index
    %172 = memref.load %arg2[%c0_102] : memref<18xf32, #tpu.memory_space<smem>>
    %173 = vector.broadcast %172 : f32 to vector<16x18xf32>
    %174 = arith.mulf %173, %167 : vector<16x18xf32>
    %c3_103 = arith.constant 3 : index
    %175 = memref.load %arg2[%c3_103] : memref<18xf32, #tpu.memory_space<smem>>
    %176 = vector.broadcast %175 : f32 to vector<16x18xf32>
    %177 = arith.mulf %176, %169 : vector<16x18xf32>
    %178 = arith.addf %174, %177 : vector<16x18xf32>
    %c6_104 = arith.constant 6 : index
    %179 = memref.load %arg2[%c6_104] : memref<18xf32, #tpu.memory_space<smem>>
    %180 = vector.broadcast %179 : f32 to vector<16x18xf32>
    %181 = arith.mulf %180, %171 : vector<16x18xf32>
    %182 = arith.addf %178, %181 : vector<16x18xf32>
    %183 = vector.extract_strided_slice %182 {offsets = [0, 0], sizes = [16, 16], strides = [1, 1]} : vector<16x18xf32> to vector<16x16xf32>
    %c1_105 = arith.constant 1 : index
    %184 = memref.load %arg2[%c1_105] : memref<18xf32, #tpu.memory_space<smem>>
    %185 = vector.broadcast %184 : f32 to vector<16x18xf32>
    %186 = arith.mulf %185, %167 : vector<16x18xf32>
    %c4_106 = arith.constant 4 : index
    %187 = memref.load %arg2[%c4_106] : memref<18xf32, #tpu.memory_space<smem>>
    %188 = vector.broadcast %187 : f32 to vector<16x18xf32>
    %189 = arith.mulf %188, %169 : vector<16x18xf32>
    %190 = arith.addf %186, %189 : vector<16x18xf32>
    %c7_107 = arith.constant 7 : index
    %191 = memref.load %arg2[%c7_107] : memref<18xf32, #tpu.memory_space<smem>>
    %192 = vector.broadcast %191 : f32 to vector<16x18xf32>
    %193 = arith.mulf %192, %171 : vector<16x18xf32>
    %194 = arith.addf %190, %193 : vector<16x18xf32>
    %195 = vector.extract_strided_slice %194 {offsets = [0, 1], sizes = [16, 16], strides = [1, 1]} : vector<16x18xf32> to vector<16x16xf32>
    %c2_108 = arith.constant 2 : index
    %196 = memref.load %arg2[%c2_108] : memref<18xf32, #tpu.memory_space<smem>>
    %197 = vector.broadcast %196 : f32 to vector<16x18xf32>
    %198 = arith.mulf %197, %167 : vector<16x18xf32>
    %c5_109 = arith.constant 5 : index
    %199 = memref.load %arg2[%c5_109] : memref<18xf32, #tpu.memory_space<smem>>
    %200 = vector.broadcast %199 : f32 to vector<16x18xf32>
    %201 = arith.mulf %200, %169 : vector<16x18xf32>
    %202 = arith.addf %198, %201 : vector<16x18xf32>
    %c8_110 = arith.constant 8 : index
    %203 = memref.load %arg2[%c8_110] : memref<18xf32, #tpu.memory_space<smem>>
    %204 = vector.broadcast %203 : f32 to vector<16x18xf32>
    %205 = arith.mulf %204, %171 : vector<16x18xf32>
    %206 = arith.addf %202, %205 : vector<16x18xf32>
    %207 = vector.extract_strided_slice %206 {offsets = [0, 2], sizes = [16, 16], strides = [1, 1]} : vector<16x18xf32> to vector<16x16xf32>
    %c1_111 = arith.constant 1 : index
    %c0_112 = arith.constant 0 : index
    %c0_113 = arith.constant 0 : index
    %208 = vector.load %arg5[%c1_111, %c0_112, %c0_113] : memref<2x18x18xf32, #tpu.memory_space<vmem>>, vector<1x16x18xf32>
    %209 = vector.shape_cast %208 : vector<1x16x18xf32> to vector<16x18xf32>
    %c1_114 = arith.constant 1 : index
    %c1_115 = arith.constant 1 : index
    %c0_116 = arith.constant 0 : index
    %210 = vector.load %arg5[%c1_114, %c1_115, %c0_116] : memref<2x18x18xf32, #tpu.memory_space<vmem>>, vector<1x16x18xf32>
    %211 = vector.shape_cast %210 : vector<1x16x18xf32> to vector<16x18xf32>
    %c1_117 = arith.constant 1 : index
    %c2_118 = arith.constant 2 : index
    %c0_119 = arith.constant 0 : index
    %212 = vector.load %arg5[%c1_117, %c2_118, %c0_119] : memref<2x18x18xf32, #tpu.memory_space<vmem>>, vector<1x16x18xf32>
    %213 = vector.shape_cast %212 : vector<1x16x18xf32> to vector<16x18xf32>
    %c9_120 = arith.constant 9 : index
    %214 = memref.load %arg2[%c9_120] : memref<18xf32, #tpu.memory_space<smem>>
    %215 = vector.broadcast %214 : f32 to vector<16x18xf32>
    %216 = arith.mulf %215, %209 : vector<16x18xf32>
    %c12_121 = arith.constant 12 : index
    %217 = memref.load %arg2[%c12_121] : memref<18xf32, #tpu.memory_space<smem>>
    %218 = vector.broadcast %217 : f32 to vector<16x18xf32>
    %219 = arith.mulf %218, %211 : vector<16x18xf32>
    %220 = arith.addf %216, %219 : vector<16x18xf32>
    %c15_122 = arith.constant 15 : index
    %221 = memref.load %arg2[%c15_122] : memref<18xf32, #tpu.memory_space<smem>>
    %222 = vector.broadcast %221 : f32 to vector<16x18xf32>
    %223 = arith.mulf %222, %213 : vector<16x18xf32>
    %224 = arith.addf %220, %223 : vector<16x18xf32>
    %225 = vector.extract_strided_slice %224 {offsets = [0, 0], sizes = [16, 16], strides = [1, 1]} : vector<16x18xf32> to vector<16x16xf32>
    %c10_123 = arith.constant 10 : index
    %226 = memref.load %arg2[%c10_123] : memref<18xf32, #tpu.memory_space<smem>>
    %227 = vector.broadcast %226 : f32 to vector<16x18xf32>
    %228 = arith.mulf %227, %209 : vector<16x18xf32>
    %c13_124 = arith.constant 13 : index
    %229 = memref.load %arg2[%c13_124] : memref<18xf32, #tpu.memory_space<smem>>
    %230 = vector.broadcast %229 : f32 to vector<16x18xf32>
    %231 = arith.mulf %230, %211 : vector<16x18xf32>
    %232 = arith.addf %228, %231 : vector<16x18xf32>
    %c16_125 = arith.constant 16 : index
    %233 = memref.load %arg2[%c16_125] : memref<18xf32, #tpu.memory_space<smem>>
    %234 = vector.broadcast %233 : f32 to vector<16x18xf32>
    %235 = arith.mulf %234, %213 : vector<16x18xf32>
    %236 = arith.addf %232, %235 : vector<16x18xf32>
    %237 = vector.extract_strided_slice %236 {offsets = [0, 1], sizes = [16, 16], strides = [1, 1]} : vector<16x18xf32> to vector<16x16xf32>
    %c11_126 = arith.constant 11 : index
    %238 = memref.load %arg2[%c11_126] : memref<18xf32, #tpu.memory_space<smem>>
    %239 = vector.broadcast %238 : f32 to vector<16x18xf32>
    %240 = arith.mulf %239, %209 : vector<16x18xf32>
    %c14_127 = arith.constant 14 : index
    %241 = memref.load %arg2[%c14_127] : memref<18xf32, #tpu.memory_space<smem>>
    %242 = vector.broadcast %241 : f32 to vector<16x18xf32>
    %243 = arith.mulf %242, %211 : vector<16x18xf32>
    %244 = arith.addf %240, %243 : vector<16x18xf32>
    %c17_128 = arith.constant 17 : index
    %245 = memref.load %arg2[%c17_128] : memref<18xf32, #tpu.memory_space<smem>>
    %246 = vector.broadcast %245 : f32 to vector<16x18xf32>
    %247 = arith.mulf %246, %213 : vector<16x18xf32>
    %248 = arith.addf %244, %247 : vector<16x18xf32>
    %249 = vector.extract_strided_slice %248 {offsets = [0, 2], sizes = [16, 16], strides = [1, 1]} : vector<16x18xf32> to vector<16x16xf32>
    %250 = arith.addf %183, %195 : vector<16x16xf32>
    %251 = arith.addf %207, %225 : vector<16x16xf32>
    %252 = arith.addf %250, %251 : vector<16x16xf32>
    %253 = arith.addf %237, %249 : vector<16x16xf32>
    %254 = arith.addf %252, %253 : vector<16x16xf32>
    %255 = vector.broadcast %26 : f32 to vector<16x16xf32>
    %256 = arith.addf %254, %255 : vector<16x16xf32>
    %257 = arith.negf %256 : vector<16x16xf32>
    %258 = math.exp %257 : vector<16x16xf32>
    %cst_129 = arith.constant 1.000000e+00 : f32
    %259 = vector.broadcast %cst_129 : f32 to vector<16x16xf32>
    %260 = arith.addf %259, %258 : vector<16x16xf32>
    %261 = arith.divf %259, %260 : vector<16x16xf32>
    %c1_130 = arith.constant 1 : index
    %c0_131 = arith.constant 0 : index
    %c0_132 = arith.constant 0 : index
    %c0_133 = arith.constant 0 : index
    %262 = vector.load %arg4[%c1_130, %c0_131, %c0_132, %c0_133] : memref<2x1x16x16xf32, #tpu.memory_space<vmem>>, vector<1x1x16x16xf32>
    %263 = vector.shape_cast %262 : vector<1x1x16x16xf32> to vector<16x16xf32>
    %264 = vector.shape_cast %261 : vector<16x16xf32> to vector<1x1x16x16xf32>
    tpu.vector_store %arg4[%c1_130, %c0_131, %c0_132, %c0_133], %264 {strides = array<i32>} : memref<2x1x16x16xf32, #tpu.memory_space<vmem>>, vector<1x1x16x16xf32>,
    return
  }
  func.func @transform_0(%arg0: i32) -> (i32, i32, i32, i32) {
    %c0_i32 = arith.constant 0 : i32
    %c0_i32_0 = arith.constant 0 : i32
    %c0_i32_1 = arith.constant 0 : i32
    %c0_i32_2 = arith.constant 0 : i32
    return %arg0, %c0_i32, %c0_i32_0, %c0_i32_1 : i32, i32, i32, i32
  }
  func.func @transform_1(%arg0: i32) -> i32 {
    %c0_i32 = arith.constant 0 : i32
    %c0_i32_0 = arith.constant 0 : i32
    return %c0_i32 : i32
  }
  func.func @transform_2(%arg0: i32) -> i32 {
    %c0_i32 = arith.constant 0 : i32
    %c0_i32_0 = arith.constant 0 : i32
    return %c0_i32 : i32
  }
  func.func @transform_3(%arg0: i32) -> (i32, i32, i32, i32) {
    %c0_i32 = arith.constant 0 : i32
    %c0_i32_0 = arith.constant 0 : i32
    %c0_i32_1 = arith.constant 0 : i32
    %c0_i32_2 = arith.constant 0 : i32
    return %arg0, %c0_i32, %c0_i32_0, %c0_i32_1 : i32, i32, i32, i32
  }
}

</mosaic_0001>

<llo_original>
// kernel: spatial_attention.1
$region0: #{spatial_attention.1}
  #allocation0 [shape = 'u32[]', space=smem, size = 0x4, offset = 0x4, fixed_abs, tag = 'smem constant byte address 0x4 - core index']
  #allocation1 [shape = 'u32[72,128]{1,0:T(1,128)}', space=vmem, size = 0x9000, scoped, tag = 'internal scratch']
  #allocation2 [shape = 'f32[2,18,18]{2,1,0:T(8,128)}', space=vmem, size = 0x6000, scoped, tag = 'scratch operand']
  #allocation3 [shape = 'f32[1]{0:T(128)S(6)}', space=smem, size = 0x200, scoped, tag = 'scoped memory for spatial_attention.1']
  %s0 = inlined_call_operand.hbm [shape: f32[2,4,16,16], index: 0, kind: input, shape index: {}]
  %s1 = inlined_call_operand.vmem [shape: f32[18], index: 1, kind: input, shape index: {}]
  %s2 = inlined_call_operand.<no memory space> [shape: f32[1], index: 2, kind: input, shape index: {}]
  %s3 = inlined_call_operand.hbm [shape: f32[2,1,16,16], index: 3, kind: output, shape index: {}]
  %s4 = sld [smem:[#allocation0]]
  $region30: #{spatial_attention.1} parent=0
    _
  %s6 = ssub.s32 1, %s4
  %s7 = scalar_select 0, %s6, %s4
  %8 = sst [smem:[#allocation3]] %s2
  $region1: #{spatial_attention.1} parent=0
    #allocation4 [shape = 'u8[65536]{0}', space=vmem, size = 0x10000, scoped, tag = 'input window, operand 0, single buffered']
    #allocation5 [shape = 's32[1]{0}', space=sflag, size = 0x4, scoped, tag = 'scoped memory for spatial_attention.1']
    #allocation6 [shape = 's32[1]{0}', space=sflag, size = 0x4, scoped, tag = 'scoped memory for spatial_attention.1']
    #allocation7 [shape = 's32[1]{0}', space=sflag, size = 0x4, scoped, tag = 'scoped memory for spatial_attention.1']
    #allocation8 [shape = 'u8[512]{0}', space=smem, size = 0x200, scoped, tag = 'input window, operand 1, single buffered']
    #allocation9 [shape = 'u8[16384]{0}', space=vmem, size = 0x4000, scoped, tag = 'output window, operand 0, single buffered']
    %9 = vsyncpa [#allocation5], 0
    %10 = vsyncpa [#allocation7], 0
    %11 = vsyncpa [#allocation6], 0
    // Predicated region
    $region2: #{spatial_attention.1} parent=1 // pred_check
      _
    $region3: #{spatial_attention.1} parent=1 // pred_check_branch
      %13 = sbr.rel (0) target = $region5
    $region4: #{spatial_attention.1} parent=1 // pred_region
      %15 = vsyncadd [#allocation5], 0
      %s16 = sshll.u32 %s0, 4
      %s17 = int_to_ptr.hbm [resolvable:$true] %s16
      %s18 = sshll.u32 [#allocation4], 4
      %s19 = int_to_ptr.vmem [resolvable:$true] %s18
      %24 = dma.hbm_to_vmem [thread:$0]  %s17, 2048, %s19, [#allocation5], 128, 128, 8
    $region5: #{spatial_attention.1} parent=1 // pred_fallthru
      _
    // Predicated region
    $region6: #{spatial_attention.1} parent=1 // pred_check
      _
    $region7: #{spatial_attention.1} parent=1 // pred_check_branch
      %26 = sbr.rel (0) target = $region9
    $region8: #{spatial_attention.1} parent=1 // pred_region
      %28 = vsyncadd [#allocation7], 0
      %s30 = sshll.u32 %s1, 4
      %s31 = int_to_ptr.vmem [resolvable:$true] %s30
      %33 = dma.vmem_to_smem %s31, 16, [#allocation8], [#allocation7]
    $region9: #{spatial_attention.1} parent=1 // pred_fallthru
      _
    // Predicated region
    $region10: #{spatial_attention.1} parent=1 // pred_check
      _
    $region11: #{spatial_attention.1} parent=1 // pred_check_branch
      %35 = sbr.rel (0) target = $region13
    $region12: #{spatial_attention.1} parent=1 // pred_region
      _
    $region13: #{spatial_attention.1} parent=1 // pred_fallthru
      _
    // Predicated region
    $region14: #{spatial_attention.1} parent=1 // pred_check
      _
    $region15: #{spatial_attention.1} parent=1 // pred_check_branch
      %37 = sbr.rel (0) target = $region17
    $region16: #{spatial_attention.1} parent=1 // pred_region
      %39 = dma.done [#allocation5], 2048
    $region17: #{spatial_attention.1} parent=1 // pred_fallthru
      _
    // Predicated region
    $region18: #{spatial_attention.1} parent=1 // pred_check
      _
    $region19: #{spatial_attention.1} parent=1 // pred_check_branch
      %41 = sbr.rel (0) target = $region21
    $region20: #{spatial_attention.1} parent=1 // pred_region
      %43 = dma.done [#allocation7], 16
    $region21: #{spatial_attention.1} parent=1 // pred_fallthru
      _
    %44 = sfence
    %vm45 = vcmask 139264
    %46 = vst.msk [vmem:[#allocation2] sm:$0x1] %vm45, 0.0
    %47 = vst.msk [vmem:[#allocation2 + $0x11] sm:$0x1] %vm45, 0.0
    %vm48 = vcmask 7168
    %49 = vst.msk [vmem:[#allocation2] sm:$0xff] %vm48, 0.0
    %50 = vst.msk [vmem:[#allocation2 + $0x8] sm:$0xff] %vm48, 0.0
    %vm51 = vcmask 1024
    %52 = vst.msk [vmem:[#allocation2 + $0x10] sm:$0x3] %vm51, 0.0
    %vm53 = vcmask 146568
    %54 = vst.msk [vmem:[#allocation2] sm:$0xff] %vm53, 0.0
    %55 = vst.msk [vmem:[#allocation2 + $0x8] sm:$0xff] %vm53, 0.0
    %vm56 = vcmask 140424
    %57 = vst.msk [vmem:[#allocation2 + $0x10] sm:$0x3] %vm56, 0.0
    %s58 = scalar_lea.vmem [#allocation2], 24
    %59 = vst.msk [vmem:[%s58] sm:$0x1] %vm45, 0.0
    %60 = vst.msk [vmem:[%s58 + $0x11] sm:$0x1] %vm45, 0.0
    %61 = vst.msk [vmem:[%s58] sm:$0xff] %vm48, 0.0
    %62 = vst.msk [vmem:[%s58 + $0x8] sm:$0xff] %vm48, 0.0
    %63 = vst.msk [vmem:[%s58 + $0x10] sm:$0x3] %vm51, 0.0
    %64 = vst.msk [vmem:[%s58] sm:$0xff] %vm53, 0.0
    %65 = vst.msk [vmem:[%s58 + $0x8] sm:$0xff] %vm53, 0.0
    %66 = vst.msk [vmem:[%s58 + $0x10] sm:$0x3] %vm56, 0.0
    %s67 = sld [smem:[#allocation3]]
    %v68 = vld [vmem:[#allocation4] sm:$0xff]
    %v69 = vld [vmem:[#allocation4 + $0x8] sm:$0xff]
    %s70 = scalar_lea.vmem [#allocation4], 16
    %v71 = vld [vmem:[%s70] sm:$0xff]
    %v72 = vld [vmem:[%s70 + $0x8] sm:$0xff]
    %v73 = vadd.f32 %v68, %v71
    %v74 = vadd.f32 %v69, %v72
    %v75 = vmax.f32 %v68, %v71
    %v76 = vmax.f32 %v69, %v72
    %s77 = scalar_lea.vmem [#allocation4], 32
    %v78 = vld [vmem:[%s77] sm:$0xff]
    %v79 = vld [vmem:[%s77 + $0x8] sm:$0xff]
    %v80 = vadd.f32 %v73, %v78
    %v81 = vadd.f32 %v74, %v79
    %v82 = vmax.f32 %v75, %v78
    %v83 = vmax.f32 %v76, %v79
    %s84 = scalar_lea.vmem [#allocation4], 48
    %v85 = vld [vmem:[%s84] sm:$0xff]
    %v86 = vld [vmem:[%s84 + $0x8] sm:$0xff]
    %v87 = vadd.f32 %v80, %v85
    %v88 = vadd.f32 %v81, %v86
    %v89 = vmax.f32 %v82, %v85
    %v90 = vmax.f32 %v83, %v86
    %93 = vrot.lane.b32.xlu0 %v87, 1
    %v94 = vpop.permute.xlu0 %93
    %95 = vrot.lane.b32.xlu0 %v88, 1
    %v96 = vpop.permute.xlu0 %95
    %vm99 = vcmask 138248
    %100 = vst.msk [vmem:[#allocation2 + $0x1] sm:$0xff] %vm99, %v94
    %101 = vst.msk [vmem:[#allocation2 + $0x9] sm:$0xff] %vm99, %v96
    %104 = vrot.lane.b32.xlu0 %v89, 1
    %v105 = vpop.permute.xlu0 %104
    %106 = vrot.lane.b32.xlu0 %v90, 1
    %v107 = vpop.permute.xlu0 %106
    %110 = vst.msk [vmem:[%s58 + $0x1] sm:$0xff] %vm99, %v105
    %111 = vst.msk [vmem:[%s58 + $0x9] sm:$0xff] %vm99, %v107
    %v112 = vld [vmem:[#allocation2] sm:$0xff]
    %v113 = vld [vmem:[#allocation2 + $0x8] sm:$0xff]
    %v114 = vld [vmem:[#allocation2 + $0x1] sm:$0xff]
    %v115 = vld [vmem:[#allocation2 + $0x9] sm:$0xff]
    %v116 = vld [vmem:[#allocation2 + $0x2] sm:$0xff]
    %v117 = vld [vmem:[#allocation2 + $0xa] sm:$0xff]
    %s118 = sld [smem:[#allocation8]]
    %v119 = vstv %s118
    %v120 = vmul.f32 %v119, %v112
    %v121 = vmul.f32 %v119, %v113
    %s122 = sld [smem:[#allocation8 + $0x3]]
    %v123 = vstv %s122
    %v124 = vmul.f32 %v123, %v114
    %v125 = vmul.f32 %v123, %v115
    %v126 = vadd.f32 %v120, %v124
    %v127 = vadd.f32 %v121, %v125
    %s128 = sld [smem:[#allocation8 + $0x6]]
    %v129 = vstv %s128
    %v130 = vmul.f32 %v129, %v116
    %v131 = vmul.f32 %v129, %v117
    %v132 = vadd.f32 %v126, %v130
    %v133 = vadd.f32 %v127, %v131
    %s134 = sld [smem:[#allocation8 + $0x1]]
    %v135 = vstv %s134
    %v136 = vmul.f32 %v135, %v112
    %v137 = vmul.f32 %v135, %v113
    %s138 = sld [smem:[#allocation8 + $0x4]]
    %v139 = vstv %s138
    %v140 = vmul.f32 %v139, %v114
    %v141 = vmul.f32 %v139, %v115
    %v142 = vadd.f32 %v136, %v140
    %v143 = vadd.f32 %v137, %v141
    %s144 = sld [smem:[#allocation8 + $0x7]]
    %v145 = vstv %s144
    %v146 = vmul.f32 %v145, %v116
    %v147 = vmul.f32 %v145, %v117
    %v148 = vadd.f32 %v142, %v146
    %v149 = vadd.f32 %v143, %v147
    %s150 = sld [smem:[#allocation8 + $0x2]]
    %v151 = vstv %s150
    %v152 = vmul.f32 %v151, %v112
    %v153 = vmul.f32 %v151, %v113
    %s154 = sld [smem:[#allocation8 + $0x5]]
    %v155 = vstv %s154
    %v156 = vmul.f32 %v155, %v114
    %v157 = vmul.f32 %v155, %v115
    %v158 = vadd.f32 %v152, %v156
    %v159 = vadd.f32 %v153, %v157
    %s160 = sld [smem:[#allocation8 + $0x8]]
    %v161 = vstv %s160
    %v162 = vmul.f32 %v161, %v116
    %v163 = vmul.f32 %v161, %v117
    %v164 = vadd.f32 %v158, %v162
    %v165 = vadd.f32 %v159, %v163
    %v166 = vld [vmem:[%s58] sm:$0xff]
    %v167 = vld [vmem:[%s58 + $0x8] sm:$0xff]
    %v168 = vld [vmem:[%s58 + $0x1] sm:$0xff]
    %v169 = vld [vmem:[%s58 + $0x9] sm:$0xff]
    %v170 = vld [vmem:[%s58 + $0x2] sm:$0xff]
    %v171 = vld [vmem:[%s58 + $0xa] sm:$0xff]
    %s172 = sld [smem:[#allocation8 + $0x9]]
    %v173 = vstv %s172
    %v174 = vmul.f32 %v173, %v166
    %v175 = vmul.f32 %v173, %v167
    %s176 = sld [smem:[#allocation8 + $0xc]]
    %v177 = vstv %s176
    %v178 = vmul.f32 %v177, %v168
    %v179 = vmul.f32 %v177, %v169
    %v180 = vadd.f32 %v174, %v178
    %v181 = vadd.f32 %v175, %v179
    %s182 = sld [smem:[#allocation8 + $0xf]]
    %v183 = vstv %s182
    %v184 = vmul.f32 %v183, %v170
    %v185 = vmul.f32 %v183, %v171
    %v186 = vadd.f32 %v180, %v184
    %v187 = vadd.f32 %v181, %v185
    %s188 = sld [smem:[#allocation8 + $0xa]]
    %v189 = vstv %s188
    %v190 = vmul.f32 %v189, %v166
    %v191 = vmul.f32 %v189, %v167
    %s192 = sld [smem:[#allocation8 + $0xd]]
    %v193 = vstv %s192
    %v194 = vmul.f32 %v193, %v168
    %v195 = vmul.f32 %v193, %v169
    %v196 = vadd.f32 %v190, %v194
    %v197 = vadd.f32 %v191, %v195
    %s198 = sld [smem:[#allocation8 + $0x10]]
    %v199 = vstv %s198
    %v200 = vmul.f32 %v199, %v170
    %v201 = vmul.f32 %v199, %v171
    %v202 = vadd.f32 %v196, %v200
    %v203 = vadd.f32 %v197, %v201
    %s204 = sld [smem:[#allocation8 + $0xb]]
    %v205 = vstv %s204
    %v206 = vmul.f32 %v205, %v166
    %v207 = vmul.f32 %v205, %v167
    %s208 = sld [smem:[#allocation8 + $0xe]]
    %v209 = vstv %s208
    %v210 = vmul.f32 %v209, %v168
    %v211 = vmul.f32 %v209, %v169
    %v212 = vadd.f32 %v206, %v210
    %v213 = vadd.f32 %v207, %v211
    %s214 = sld [smem:[#allocation8 + $0x11]]
    %v215 = vstv %s214
    %v216 = vmul.f32 %v215, %v170
    %v217 = vmul.f32 %v215, %v171
    %v218 = vadd.f32 %v212, %v216
    %v219 = vadd.f32 %v213, %v217
    %222 = vrot.lane.b32.xlu0 %v148, 127
    %v223 = vpop.permute.xlu0 %222
    %224 = vrot.lane.b32.xlu0 %v149, 127
    %v225 = vpop.permute.xlu0 %224
    %v228 = vadd.f32 %v132, %v223
    %v229 = vadd.f32 %v133, %v225
    %232 = vrot.lane.b32.xlu0 %v186, 2
    %v233 = vpop.permute.xlu0 %232
    %234 = vrot.lane.b32.xlu0 %v187, 2
    %v235 = vpop.permute.xlu0 %234
    %v238 = vadd.f32 %v164, %v233
    %v239 = vadd.f32 %v165, %v235
    %242 = vrot.lane.b32.xlu0 %v238, 126
    %v243 = vpop.permute.xlu0 %242
    %244 = vrot.lane.b32.xlu0 %v239, 126
    %v245 = vpop.permute.xlu0 %244
    %v248 = vadd.f32 %v228, %v243
    %v249 = vadd.f32 %v229, %v245
    %252 = vrot.lane.b32.xlu0 %v218, 127
    %v253 = vpop.permute.xlu0 %252
    %254 = vrot.lane.b32.xlu0 %v219, 127
    %v255 = vpop.permute.xlu0 %254
    %v258 = vadd.f32 %v202, %v253
    %v259 = vadd.f32 %v203, %v255
    %262 = vrot.lane.b32.xlu0 %v258, 127
    %v263 = vpop.permute.xlu0 %262
    %264 = vrot.lane.b32.xlu0 %v259, 127
    %v265 = vpop.permute.xlu0 %264
    %v268 = vadd.f32 %v248, %v263
    %v269 = vadd.f32 %v249, %v265
    %v270 = vstv %s67
    %v271 = vadd.f32 %v268, %v270
    %v272 = vadd.f32 %v269, %v270
    %v273 = vxor.u32 %v271, 2147483648
    %v274 = vxor.u32 %v272, 2147483648
    %v275 = vmul.f32 %v273, 1.442695
    %v276 = vpow.pop %v275
    %v277 = vmul.f32 %v274, 1.442695
    %v278 = vpow.pop %v277
    %v279 = vadd.f32 %v276, 1.0
    %v280 = vadd.f32 %v278, 1.0
    %v281 = vrcp.pop %v279
    %v282 = vmul.f32 %v279, %v281
    %v283 = vsub.f32 1.0, %v282
    %v284 = vmul.f32 %v281, %v283
    %v285 = vadd.f32 %v281, %v284
    %vm286 = vweird.f32 %v279
    %vm287 = vweird.f32 %v281
    %vm288 = vmor %vm286, %vm287
    %v289 = vsel %vm288, %v281, %v285
    %v290 = vand.u32 2147483647, %v279
    %vm291 = vcmp.eq.f32.partialorder %v290, 8.507059e+37
    %v292 = vand.u32 %v279, 2147483648
    %v293 = vor.u32 1.1754944e-38, %v292
    %v294 = vsel %vm291, %v293, %v289
    %v295 = vmul.f32 1.0, %v294
    %v296 = vrcp.pop %v280
    %v297 = vmul.f32 %v280, %v296
    %v298 = vsub.f32 1.0, %v297
    %v299 = vmul.f32 %v296, %v298
    %v300 = vadd.f32 %v296, %v299
    %vm301 = vweird.f32 %v280
    %vm302 = vweird.f32 %v296
    %vm303 = vmor %vm301, %vm302
    %v304 = vsel %vm303, %v296, %v300
    %v305 = vand.u32 2147483647, %v280
    %vm306 = vcmp.eq.f32.partialorder %v305, 8.507059e+37
    %v307 = vand.u32 %v280, 2147483648
    %v308 = vor.u32 1.1754944e-38, %v307
    %v309 = vsel %vm306, %v308, %v304
    %v310 = vmul.f32 1.0, %v309
    %vm311 = vcmask 130048
    %312 = vst.msk [vmem:[#allocation9] sm:$0xff] %vm311, %v295
    %313 = vst.msk [vmem:[#allocation9 + $0x8] sm:$0xff] %vm311, %v310
    %s314 = scalar_lea.vmem [#allocation4], 64
    %v315 = vld [vmem:[%s314] sm:$0xff]
    %v316 = vld [vmem:[%s314 + $0x8] sm:$0xff]
    %s317 = scalar_lea.vmem [#allocation4], 80
    %v318 = vld [vmem:[%s317] sm:$0xff]
    %v319 = vld [vmem:[%s317 + $0x8] sm:$0xff]
    %v320 = vadd.f32 %v315, %v318
    %v321 = vadd.f32 %v316, %v319
    %v322 = vmax.f32 %v315, %v318
    %v323 = vmax.f32 %v316, %v319
    %s324 = scalar_lea.vmem [#allocation4], 96
    %v325 = vld [vmem:[%s324] sm:$0xff]
    %v326 = vld [vmem:[%s324 + $0x8] sm:$0xff]
    %v327 = vadd.f32 %v320, %v325
    %v328 = vadd.f32 %v321, %v326
    %v329 = vmax.f32 %v322, %v325
    %v330 = vmax.f32 %v323, %v326
    %s331 = scalar_lea.vmem [#allocation4], 112
    %v332 = vld [vmem:[%s331] sm:$0xff]
    %v333 = vld [vmem:[%s331 + $0x8] sm:$0xff]
    %v334 = vadd.f32 %v327, %v332
    %v335 = vadd.f32 %v328, %v333
    %v336 = vmax.f32 %v329, %v332
    %v337 = vmax.f32 %v330, %v333
    %340 = vrot.lane.b32.xlu0 %v334, 1
    %v341 = vpop.permute.xlu0 %340
    %342 = vrot.lane.b32.xlu0 %v335, 1
    %v343 = vpop.permute.xlu0 %342
    %346 = vst.msk [vmem:[#allocation2 + $0x1] sm:$0xff] %vm99, %v341
    %347 = vst.msk [vmem:[#allocation2 + $0x9] sm:$0xff] %vm99, %v343
    %350 = vrot.lane.b32.xlu0 %v336, 1
    %v351 = vpop.permute.xlu0 %350
    %352 = vrot.lane.b32.xlu0 %v337, 1
    %v353 = vpop.permute.xlu0 %352
    %356 = vst.msk [vmem:[%s58 + $0x1] sm:$0xff] %vm99, %v351
    %357 = vst.msk [vmem:[%s58 + $0x9] sm:$0xff] %vm99, %v353
    %v358 = vld [vmem:[#allocation2] sm:$0xff]
    %v359 = vld [vmem:[#allocation2 + $0x8] sm:$0xff]
    %v360 = vld [vmem:[#allocation2 + $0x1] sm:$0xff]
    %v361 = vld [vmem:[#allocation2 + $0x9] sm:$0xff]
    %v362 = vld [vmem:[#allocation2 + $0x2] sm:$0xff]
    %v363 = vld [vmem:[#allocation2 + $0xa] sm:$0xff]
    %s364 = sld [smem:[#allocation8]]
    %v365 = vstv %s364
    %v366 = vmul.f32 %v365, %v358
    %v367 = vmul.f32 %v365, %v359
    %s368 = sld [smem:[#allocation8 + $0x3]]
    %v369 = vstv %s368
    %v370 = vmul.f32 %v369, %v360
    %v371 = vmul.f32 %v369, %v361
    %v372 = vadd.f32 %v366, %v370
    %v373 = vadd.f32 %v367, %v371
    %s374 = sld [smem:[#allocation8 + $0x6]]
    %v375 = vstv %s374
    %v376 = vmul.f32 %v375, %v362
    %v377 = vmul.f32 %v375, %v363
    %v378 = vadd.f32 %v372, %v376
    %v379 = vadd.f32 %v373, %v377
    %s380 = sld [smem:[#allocation8 + $0x1]]
    %v381 = vstv %s380
    %v382 = vmul.f32 %v381, %v358
    %v383 = vmul.f32 %v381, %v359
    %s384 = sld [smem:[#allocation8 + $0x4]]
    %v385 = vstv %s384
    %v386 = vmul.f32 %v385, %v360
    %v387 = vmul.f32 %v385, %v361
    %v388 = vadd.f32 %v382, %v386
    %v389 = vadd.f32 %v383, %v387
    %s390 = sld [smem:[#allocation8 + $0x7]]
    %v391 = vstv %s390
    %v392 = vmul.f32 %v391, %v362
    %v393 = vmul.f32 %v391, %v363
    %v394 = vadd.f32 %v388, %v392
    %v395 = vadd.f32 %v389, %v393
    %s396 = sld [smem:[#allocation8 + $0x2]]
    %v397 = vstv %s396
    %v398 = vmul.f32 %v397, %v358
    %v399 = vmul.f32 %v397, %v359
    %s400 = sld [smem:[#allocation8 + $0x5]]
    %v401 = vstv %s400
    %v402 = vmul.f32 %v401, %v360
    %v403 = vmul.f32 %v401, %v361
    %v404 = vadd.f32 %v398, %v402
    %v405 = vadd.f32 %v399, %v403
    %s406 = sld [smem:[#allocation8 + $0x8]]
    %v407 = vstv %s406
    %v408 = vmul.f32 %v407, %v362
    %v409 = vmul.f32 %v407, %v363
    %v410 = vadd.f32 %v404, %v408
    %v411 = vadd.f32 %v405, %v409
    %v412 = vld [vmem:[%s58] sm:$0xff]
    %v413 = vld [vmem:[%s58 + $0x8] sm:$0xff]
    %v414 = vld [vmem:[%s58 + $0x1] sm:$0xff]
    %v415 = vld [vmem:[%s58 + $0x9] sm:$0xff]
    %v416 = vld [vmem:[%s58 + $0x2] sm:$0xff]
    %v417 = vld [vmem:[%s58 + $0xa] sm:$0xff]
    %s418 = sld [smem:[#allocation8 + $0x9]]
    %v419 = vstv %s418
    %v420 = vmul.f32 %v419, %v412
    %v421 = vmul.f32 %v419, %v413
    %s422 = sld [smem:[#allocation8 + $0xc]]
    %v423 = vstv %s422
    %v424 = vmul.f32 %v423, %v414
    %v425 = vmul.f32 %v423, %v415
    %v426 = vadd.f32 %v420, %v424
    %v427 = vadd.f32 %v421, %v425
    %s428 = sld [smem:[#allocation8 + $0xf]]
    %v429 = vstv %s428
    %v430 = vmul.f32 %v429, %v416
    %v431 = vmul.f32 %v429, %v417
    %v432 = vadd.f32 %v426, %v430
    %v433 = vadd.f32 %v427, %v431
    %s434 = sld [smem:[#allocation8 + $0xa]]
    %v435 = vstv %s434
    %v436 = vmul.f32 %v435, %v412
    %v437 = vmul.f32 %v435, %v413
    %s438 = sld [smem:[#allocation8 + $0xd]]
    %v439 = vstv %s438
    %v440 = vmul.f32 %v439, %v414
    %v441 = vmul.f32 %v439, %v415
    %v442 = vadd.f32 %v436, %v440
    %v443 = vadd.f32 %v437, %v441
    %s444 = sld [smem:[#allocation8 + $0x10]]
    %v445 = vstv %s444
    %v446 = vmul.f32 %v445, %v416
    %v447 = vmul.f32 %v445, %v417
    %v448 = vadd.f32 %v442, %v446
    %v449 = vadd.f32 %v443, %v447
    %s450 = sld [smem:[#allocation8 + $0xb]]
    %v451 = vstv %s450
    %v452 = vmul.f32 %v451, %v412
    %v453 = vmul.f32 %v451, %v413
    %s454 = sld [smem:[#allocation8 + $0xe]]
    %v455 = vstv %s454
    %v456 = vmul.f32 %v455, %v414
    %v457 = vmul.f32 %v455, %v415
    %v458 = vadd.f32 %v452, %v456
    %v459 = vadd.f32 %v453, %v457
    %s460 = sld [smem:[#allocation8 + $0x11]]
    %v461 = vstv %s460
    %v462 = vmul.f32 %v461, %v416
    %v463 = vmul.f32 %v461, %v417
    %v464 = vadd.f32 %v458, %v462
    %v465 = vadd.f32 %v459, %v463
    %468 = vrot.lane.b32.xlu0 %v394, 127
    %v469 = vpop.permute.xlu0 %468
    %470 = vrot.lane.b32.xlu0 %v395, 127
    %v471 = vpop.permute.xlu0 %470
    %v474 = vadd.f32 %v378, %v469
    %v475 = vadd.f32 %v379, %v471
    %478 = vrot.lane.b32.xlu0 %v432, 2
    %v479 = vpop.permute.xlu0 %478
    %480 = vrot.lane.b32.xlu0 %v433, 2
    %v481 = vpop.permute.xlu0 %480
    %v484 = vadd.f32 %v410, %v479
    %v485 = vadd.f32 %v411, %v481
    %488 = vrot.lane.b32.xlu0 %v484, 126
    %v489 = vpop.permute.xlu0 %488
    %490 = vrot.lane.b32.xlu0 %v485, 126
    %v491 = vpop.permute.xlu0 %490
    %v494 = vadd.f32 %v474, %v489
    %v495 = vadd.f32 %v475, %v491
    %498 = vrot.lane.b32.xlu0 %v464, 127
    %v499 = vpop.permute.xlu0 %498
    %500 = vrot.lane.b32.xlu0 %v465, 127
    %v501 = vpop.permute.xlu0 %500
    %v504 = vadd.f32 %v448, %v499
    %v505 = vadd.f32 %v449, %v501
    %508 = vrot.lane.b32.xlu0 %v504, 127
    %v509 = vpop.permute.xlu0 %508
    %510 = vrot.lane.b32.xlu0 %v505, 127
    %v511 = vpop.permute.xlu0 %510
    %v514 = vadd.f32 %v494, %v509
    %v515 = vadd.f32 %v495, %v511
    %v516 = vadd.f32 %v514, %v270
    %v517 = vadd.f32 %v515, %v270
    %v518 = vxor.u32 %v516, 2147483648
    %v519 = vxor.u32 %v517, 2147483648
    %v520 = vmul.f32 %v518, 1.442695
    %v521 = vpow.pop %v520
    %v522 = vmul.f32 %v519, 1.442695
    %v523 = vpow.pop %v522
    %v524 = vadd.f32 %v521, 1.0
    %v525 = vadd.f32 %v523, 1.0
    %v526 = vrcp.pop %v524
    %v527 = vmul.f32 %v524, %v526
    %v528 = vsub.f32 1.0, %v527
    %v529 = vmul.f32 %v526, %v528
    %v530 = vadd.f32 %v526, %v529
    %vm531 = vweird.f32 %v524
    %vm532 = vweird.f32 %v526
    %vm533 = vmor %vm531, %vm532
    %v534 = vsel %vm533, %v526, %v530
    %v535 = vand.u32 2147483647, %v524
    %vm536 = vcmp.eq.f32.partialorder %v535, 8.507059e+37
    %v537 = vand.u32 %v524, 2147483648
    %v538 = vor.u32 1.1754944e-38, %v537
    %v539 = vsel %vm536, %v538, %v534
    %v540 = vmul.f32 1.0, %v539
    %v541 = vrcp.pop %v525
    %v542 = vmul.f32 %v525, %v541
    %v543 = vsub.f32 1.0, %v542
    %v544 = vmul.f32 %v541, %v543
    %v545 = vadd.f32 %v541, %v544
    %vm546 = vweird.f32 %v525
    %vm547 = vweird.f32 %v541
    %vm548 = vmor %vm546, %vm547
    %v549 = vsel %vm548, %v541, %v545
    %v550 = vand.u32 2147483647, %v525
    %vm551 = vcmp.eq.f32.partialorder %v550, 8.507059e+37
    %v552 = vand.u32 %v525, 2147483648
    %v553 = vor.u32 1.1754944e-38, %v552
    %v554 = vsel %vm551, %v553, %v549
    %v555 = vmul.f32 1.0, %v554
    %s556 = scalar_lea.vmem [#allocation9], 16
    %557 = vst.msk [vmem:[%s556] sm:$0xff] %vm311, %v540
    %558 = vst.msk [vmem:[%s556 + $0x8] sm:$0xff] %vm311, %v555
    // Predicated region
    $region22: #{spatial_attention.1} parent=1 // pred_check
      _
    $region23: #{spatial_attention.1} parent=1 // pred_check_branch
      %560 = sbr.rel (0) target = $region25
    $region24: #{spatial_attention.1} parent=1 // pred_region
      %562 = vsyncadd [#allocation6], 0
      %s563 = sshll.u32 [#allocation9], 4
      %s564 = int_to_ptr.vmem [resolvable:$true] %s563
      %s565 = sshll.u32 %s3, 4
      %s566 = int_to_ptr.hbm [resolvable:$true] %s565
      %571 = dma.vmem_to_hbm [thread:$0]  %s564, 512, %s566, [#allocation6], 128, 128, 8
    $region25: #{spatial_attention.1} parent=1 // pred_fallthru
      _
    // Predicated region
    $region26: #{spatial_attention.1} parent=1 // pred_check
      _
    $region27: #{spatial_attention.1} parent=1 // pred_check_branch
      %573 = sbr.rel (0) target = $region29
    $region28: #{spatial_attention.1} parent=1 // pred_region
      %575 = dma.done [#allocation6], 512
    $region29: #{spatial_attention.1} parent=1 // pred_fallthru
      _
    %576 = vsyncpa [#allocation5], 1
    %577 = vsyncpa [#allocation6], 1
    %578 = vsyncpa [#allocation7], 1

</llo_original>
